<compile_context>
chip_gen: v6e
topology: v6e:2x2x1
jax: 0.10.0
libtpu: 0.0.40
codegen_flags: <defaults>
</compile_context>

<pallas_src>
import jax
import jax.numpy as jnp
from jax.experimental import pallas as pl
from jax.experimental.pallas import tpu as pltpu


def aspect_emb_kernel(x_ref, wsel_ref, o_ref):
    # x_ref:    (TB, A)     batch tile of aspect weights
    # wsel_ref: (A,  A*E)   block-diagonal aspect embedding table
    # o_ref:    (TB, A*E)   lane-dense output tile
    o_ref[...] = jnp.dot(
        x_ref[...], wsel_ref[...],
        preferred_element_type=jnp.float32,
    ).astype(o_ref.dtype)


def _pick_batch_block(batch, ae, itemsize):
    """Batch tile: ~4 MiB of output per block, a multiple of 8 sublanes,
    with an even number of grid steps (v7x has 2 TensorCores)."""
    if batch <= 8:
        return batch                              # single block == full array dims
    # ~4 MiB of output per step, rounded down to a multiple of 8 sublanes.
    target = max(8, ((4 << 20) // (ae * itemsize)) // 8 * 8)
    if target >= batch:
        return batch                              # whole batch fits in one step
    steps = pl.cdiv(batch, target)
    if steps % 2:                                 # balanced split for v7x's 2 TCs
        steps += 1
    block = ((pl.cdiv(batch, steps) + 7) // 8) * 8
    return max(8, min(block, batch))


def aspect_emb(x, W, *, block_b=None):
    """x: (B, A), W: (A, E) -> (B, A, E) with out[b,a,e] = x[b,a] * W[a,e]."""
    B, A = x.shape
    A2, E = W.shape
    assert A == A2
    AE = A * E
    out_dtype = jnp.result_type(x.dtype, W.dtype)
    itemsize = jnp.dtype(out_dtype).itemsize

    if block_b is None:
        block_b = _pick_batch_block(B, AE, itemsize)

    # Block-diagonal selection weight, built once in XLA (tiny: A x A*E).
    # Row a is zero except columns [a*E, (a+1)*E) which hold W[a, :].
    w_sel = (jnp.eye(A, dtype=W.dtype)[:, :, None] * W[None, :, :]).reshape(A, AE)

    out_flat = pl.pallas_call(
        aspect_emb_kernel,
        out_shape=jax.ShapeDtypeStruct((B, AE), out_dtype),
        grid_spec=pltpu.PrefetchScalarGridSpec(
            num_scalar_prefetch=0,
            grid=(pl.cdiv(B, block_b),),
            in_specs=[
                pl.BlockSpec((block_b, A), lambda i: (i, 0)),  # batch tile of x
                pl.BlockSpec((A, AE), lambda i: (0, 0)),       # Wsel (constant block)
            ],
            out_specs=pl.BlockSpec((block_b, AE), lambda i: (i, 0)),
        ),
        compiler_params=pltpu.CompilerParams(
            dimension_semantics=("parallel",),
            vmem_limit_bytes=32 << 20,
        ),
        cost_estimate=pl.CostEstimate(
            flops=2 * B * A * AE,
            transcendentals=0,
            bytes_accessed=(B * AE + B * A + A * AE) * itemsize,
        ),
    )(x, w_sel)

    # Free reshape back to the module's (B, A, E) output layout.
    return out_flat.reshape(B, A, E)


def aspect_emb_ref(x, W):
    # pure-JAX reference mirroring the PyTorch forward
    return x[:, :, None] * W[None, :, :]


if __name__ == "__main__":
    key = jax.random.PRNGKey(0)
    kx, kw = jax.random.split(key)

    batch = 2
    num_asp = 8
    e_dim = 32

    x = jax.random.normal(kx, (batch, num_asp), dtype=jnp.float32)
    # deterministic parameter init (stands in for torch.randn(num_asp, e_dim))
    W = jax.random.normal(kw, (num_asp, e_dim), dtype=jnp.float32)

    out = jax.block_until_ready(aspect_emb(x, W))

    ref = aspect_emb_ref(x, W)
    assert out.shape == (batch, num_asp, e_dim)
    assert jnp.allclose(out, ref, atol=1e-6, rtol=1e-6)

    print("KERNEL_OK")
</pallas_src>

<mosaic_0001>
module attributes {stable_mosaic.version = 11 : i64} {
  func.func @aspect_emb_kernel(%arg0: i32, %arg1: memref<2x8xf32, #tpu.memory_space<vmem>>, %arg2: memref<8x256xf32, #tpu.memory_space<vmem>>, %arg3: memref<2x256xf32, #tpu.memory_space<vmem>>) attributes {dimension_semantics = [#tpu.dimension_semantics<parallel>], iteration_bounds = array<i64: 1>, scalar_prefetch = 0 : i64, scratch_operands = 0 : i64, tpu.core_type = #tpu.core_type<tc>, window_params = [{transform_indices = @transform_0, window_bounds = array<i64: 2, 8>}, {pipeline_mode = #tpu.pipeline_mode<synchronous>, transform_indices = @transform_1, window_bounds = array<i64: 8, 256>}, {transform_indices = @transform_2, window_bounds = array<i64: 2, 256>}]} {
    %c0 = arith.constant 0 : index
    %c0_0 = arith.constant 0 : index
    %0 = vector.load %arg1[%c0, %c0_0] : memref<2x8xf32, #tpu.memory_space<vmem>>, vector<2x8xf32>
    %c0_1 = arith.constant 0 : index
    %c0_2 = arith.constant 0 : index
    %1 = vector.load %arg2[%c0_1, %c0_2] : memref<8x256xf32, #tpu.memory_space<vmem>>, vector<8x256xf32>
    %cst = arith.constant dense<0.000000e+00> : vector<2x256xf32>
    %2 = tpu.matmul %0, %1, %cst {dimension_numbers = #tpu.dot_dimension_numbers<[1], [0], [0], [1], [0, 0, 1, 1], [], []>} : vector<2x8xf32>, vector<8x256xf32>, vector<2x256xf32> -> vector<2x256xf32>
    %c0_3 = arith.constant 0 : index
    %c0_4 = arith.constant 0 : index
    %3 = vector.load %arg3[%c0_3, %c0_4] : memref<2x256xf32, #tpu.memory_space<vmem>>, vector<2x256xf32>
    tpu.vector_store %arg3[%c0_3, %c0_4], %2 {strides = array<i32>} : memref<2x256xf32, #tpu.memory_space<vmem>>, vector<2x256xf32>,
    return
  }
  func.func @transform_0(%arg0: i32) -> (i32, i32) {
    %c0_i32 = arith.constant 0 : i32
    %c0_i32_0 = arith.constant 0 : i32
    return %arg0, %c0_i32 : i32, i32
  }
  func.func @transform_1(%arg0: i32) -> (i32, i32) {
    %c0_i32 = arith.constant 0 : i32
    %c0_i32_0 = arith.constant 0 : i32
    %c0_i32_1 = arith.constant 0 : i32
    return %c0_i32, %c0_i32_0 : i32, i32
  }
  func.func @transform_2(%arg0: i32) -> (i32, i32) {
    %c0_i32 = arith.constant 0 : i32
    %c0_i32_0 = arith.constant 0 : i32
    return %arg0, %c0_i32 : i32, i32
  }
}

</mosaic_0001>

<llo_original>
// kernel: tpu_custom_call.1
$region0: #{tpu_custom_call.1}
  #allocation0 [shape = 'u32[]', space=smem, size = 0x4, offset = 0x4, fixed_abs, tag = 'smem constant byte address 0x4 - core index']
  #allocation1 [shape = 'u32[144,128]{1,0:T(1,128)}', space=vmem, size = 0x12000, scoped, tag = 'internal scratch']
  %s0 = inlined_call_operand.hbm [shape: f32[2,8], index: 0, kind: input, shape index: {}]
  %s1 = inlined_call_operand.hbm [shape: f32[8,256], index: 1, kind: input, shape index: {}]
  %s2 = inlined_call_operand.hbm [shape: f32[2,256], index: 2, kind: output, shape index: {}]
  %s3 = sld [smem:[#allocation0]]
  $region26: #{tpu_custom_call.1} parent=0
    _
  %s5 = ssub.s32 1, %s3
  %s6 = scalar_select 0, %s5, %s3
  $region1: #{tpu_custom_call.1} parent=0
    #allocation2 [shape = 'u8[1024]{0}', space=vmem, size = 0x400, scoped, tag = 'input window, operand 0, single buffered']
    #allocation3 [shape = 's32[1]{0}', space=sflag, size = 0x4, scoped, tag = 'scoped memory for tpu_custom_call.1']
    #allocation4 [shape = 's32[1]{0}', space=sflag, size = 0x4, scoped, tag = 'scoped memory for tpu_custom_call.1']
    #allocation5 [shape = 'u8[8192]{0}', space=vmem, size = 0x2000, scoped, tag = 'input window, operand 1, single buffered']
    #allocation6 [shape = 's32[1]{0}', space=sflag, size = 0x4, scoped, tag = 'scoped memory for tpu_custom_call.1']
    #allocation7 [shape = 'u8[2048]{0}', space=vmem, size = 0x800, scoped, tag = 'output window, operand 0, single buffered']
    %7 = vsyncpa [#allocation3], 0
    %8 = vsyncpa [#allocation6], 0
    %9 = vsyncpa [#allocation4], 0
    // Predicated region
    $region2: #{tpu_custom_call.1} parent=1 // pred_check
      _
    $region3: #{tpu_custom_call.1} parent=1 // pred_check_branch
      %11 = sbr.rel (0) target = $region5
    $region4: #{tpu_custom_call.1} parent=1 // pred_region
      %s13 = ssub.s32 32, 32
      %14 = vsyncadd [#allocation3], %s13
      %s16 = sshll.u32 [#allocation2], 4
      %s17 = int_to_ptr.vmem [resolvable:$true] %s16
      %19 = dma.hbm_to_vmem [thread:$0]  %s0, 32, %s17, [#allocation3]
    $region5: #{tpu_custom_call.1} parent=1 // pred_fallthru
      _
    // Predicated region
    $region6: #{tpu_custom_call.1} parent=1 // pred_check
      _
    $region7: #{tpu_custom_call.1} parent=1 // pred_check_branch
      %21 = sbr.rel (0) target = $region9
    $region8: #{tpu_custom_call.1} parent=1 // pred_region
      %s23 = ssub.s32 256, 256
      %24 = vsyncadd [#allocation6], %s23
      %s26 = sshll.u32 [#allocation5], 4
      %s27 = int_to_ptr.vmem [resolvable:$true] %s26
      %29 = dma.hbm_to_vmem [thread:$0]  %s1, 256, %s27, [#allocation6]
    $region9: #{tpu_custom_call.1} parent=1 // pred_fallthru
      _
    // Predicated region
    $region10: #{tpu_custom_call.1} parent=1 // pred_check
      _
    $region11: #{tpu_custom_call.1} parent=1 // pred_check_branch
      %31 = sbr.rel (0) target = $region13
    $region12: #{tpu_custom_call.1} parent=1 // pred_region
      %32 = dma.done [#allocation3], 32
    $region13: #{tpu_custom_call.1} parent=1 // pred_fallthru
      _
    // Predicated region
    $region14: #{tpu_custom_call.1} parent=1 // pred_check
      _
    $region15: #{tpu_custom_call.1} parent=1 // pred_check_branch
      %34 = sbr.rel (0) target = $region17
    $region16: #{tpu_custom_call.1} parent=1 // pred_region
      %35 = dma.done [#allocation6], 256
    $region17: #{tpu_custom_call.1} parent=1 // pred_fallthru
      _
    %v36 = vld [vmem:[#allocation2] sm:$0x3]
    %v37 = vld [vmem:[#allocation5] sm:$0xff]
    %v38 = vld [vmem:[#allocation5 + $0x8] sm:$0xff]
    %vm39 = vcmask 64512
    %v41 = vsel %vm39, %v36, 0
    %43 = vmatprep.subr.mxu0 0.0
    %44 = vmatpush1.msra.mxu0 0.0
    %45 = vmatprep.subr.mxu0 0.0
    %46 = vmatpush1.msra.mxu0 0.0
    %47 = vmatprep.subr.mxu0 0.0
    %48 = vmatpush1.msra.mxu0 0.0
    %49 = vmatprep.subr.mxu0 0.0
    %50 = vmatpush1.msra.mxu0 0.0
    %51 = vmatprep.subr.mxu0 0.0
    %52 = vmatpush1.msra.mxu0 0.0
    %53 = vmatprep.subr.mxu0 0.0
    %54 = vmatpush1.msra.mxu0 0.0
    %55 = vmatprep.subr.mxu0 0.0
    %56 = vmatpush1.msra.mxu0 0.0
    %57 = vmatprep.subr.mxu0 0.0
    %58 = vmatpush1.msra.mxu0 0.0
    %59 = vmatprep.subr.mxu0 0.0
    %60 = vmatpush1.msra.mxu0 0.0
    %61 = vmatprep.subr.mxu0 0.0
    %62 = vmatpush1.msra.mxu0 0.0
    %63 = vmatprep.subr.mxu0 0.0
    %64 = vmatpush1.msra.mxu0 0.0
    %65 = vmatprep.subr.mxu0 0.0
    %66 = vmatpush1.msra.mxu0 0.0
    %67 = vmatprep.subr.mxu0 0.0
    %68 = vmatpush1.msra.mxu0 0.0
    %69 = vmatprep.subr.mxu0 0.0
    %70 = vmatpush1.msra.mxu0 0.0
    %71 = vmatprep.subr.mxu0 0.0
    %72 = vmatpush1.msra.mxu0 0.0
    %73 = vmatprep.subr.mxu0 %v38
    %74 = vmatpush1.msra.mxu0 %v37
    %75 = vmatprep.subr.mxu0 0.0
    %76 = vmatpush2.msra.mxu0 0.0
    %77 = vmatprep.subr.mxu0 0.0
    %78 = vmatpush2.msra.mxu0 0.0
    %79 = vmatprep.subr.mxu0 0.0
    %80 = vmatpush2.msra.mxu0 0.0
    %81 = vmatprep.subr.mxu0 0.0
    %82 = vmatpush2.msra.mxu0 0.0
    %83 = vmatprep.subr.mxu0 0.0
    %84 = vmatpush2.msra.mxu0 0.0
    %85 = vmatprep.subr.mxu0 0.0
    %86 = vmatpush2.msra.mxu0 0.0
    %87 = vmatprep.subr.mxu0 0.0
    %88 = vmatpush2.msra.mxu0 0.0
    %89 = vmatprep.subr.mxu0 0.0
    %90 = vmatpush2.msra.mxu0 0.0
    %91 = vmatprep.subr.mxu0 0.0
    %92 = vmatpush2.msra.mxu0 0.0
    %93 = vmatprep.subr.mxu0 0.0
    %94 = vmatpush2.msra.mxu0 0.0
    %95 = vmatprep.subr.mxu0 0.0
    %96 = vmatpush2.msra.mxu0 0.0
    %97 = vmatprep.subr.mxu0 0.0
    %98 = vmatpush2.msra.mxu0 0.0
    %99 = vmatprep.subr.mxu0 0.0
    %100 = vmatpush2.msra.mxu0 0.0
    %101 = vmatprep.subr.mxu0 0.0
    %102 = vmatpush2.msra.mxu0 0.0
    %103 = vmatprep.subr.mxu0 0.0
    %104 = vmatpush2.msra.mxu0 0.0
    %105 = vmatprep.subr.mxu0 0.0
    %106 = vmatpush2.msra.mxu0 0.0
    %107 = vmatprep.mubr.f32.mxu0 0.0
    %108 = vmatmul.mubr.f32.gmra.mxu0 %v41
    %v109 = vpop.f32.mrf.mxu0
    %v110 = vadd.f32 0.0, %v109
    %v111 = vpop.f32.mrf.mxu0
    %v112 = vadd.f32 0.0, %v111
    %113 = vdwg.mxu0
    %v116 = vcombine.low %v110, %v112
    %v118 = vunpack.c.l.s4 1983009808
    %v119 = vunpack.c.0.s8 %v118
    %v120 = vlaneseq
    %v121 = vshrl.u32 %v120, 7
    %v122 = vsub.s32 %v119, %v121
    %v123 = vrot.slane %v116, %v122
    %125 = vst [vmem:[#allocation7] sm:$0xf] %v123
    // Predicated region
    $region18: #{tpu_custom_call.1} parent=1 // pred_check
      _
    $region19: #{tpu_custom_call.1} parent=1 // pred_check_branch
      %127 = sbr.rel (0) target = $region21
    $region20: #{tpu_custom_call.1} parent=1 // pred_region
      %s129 = ssub.s32 64, 64
      %130 = vsyncadd [#allocation4], %s129
      %s132 = sshll.u32 [#allocation7], 4
      %s133 = int_to_ptr.vmem [resolvable:$true] %s132
      %135 = dma.vmem_to_hbm [thread:$0]  %s133, 64, %s2, [#allocation4]
    $region21: #{tpu_custom_call.1} parent=1 // pred_fallthru
      _
    // Predicated region
    $region22: #{tpu_custom_call.1} parent=1 // pred_check
      _
    $region23: #{tpu_custom_call.1} parent=1 // pred_check_branch
      %137 = sbr.rel (0) target = $region25
    $region24: #{tpu_custom_call.1} parent=1 // pred_region
      %138 = dma.done [#allocation4], 64
    $region25: #{tpu_custom_call.1} parent=1 // pred_fallthru
      _
    %139 = vsyncpa [#allocation3], 1
    %140 = vsyncpa [#allocation6], 1
    %141 = vsyncpa [#allocation4], 1

</llo_original>
